<compile_context>
chip_gen: v6e
topology: v6e:2x2x1
jax: 0.10.0
libtpu: 0.0.40
codegen_flags: <defaults>
</compile_context>

<pallas_src>
import functools

import numpy as np
import jax
import jax.numpy as jnp
from jax import lax
from jax.experimental import pallas as pl
from jax.experimental.pallas import tpu as pltpu


# --------------------------------------------------------------------------- helpers (host-side, NumPy)
def _cdiv(a: int, b: int) -> int:
    return -(-a // b)


def _round_up(a: int, b: int) -> int:
    return _cdiv(a, b) * b


def _ramp_filter_matrix(n_det: int) -> np.ndarray:
    """Dense (n_det, n_det) equivalent of deepinv RampFilter along the detector dim."""
    size = int(max(64, 2 ** int(np.ceil(np.log2(2 * n_det)))))
    nvec = np.concatenate(
        [np.arange(1, size / 2 + 1, 2), np.arange(size / 2 - 1, 0, -2)]
    )
    f = np.zeros(size, dtype=np.float64)
    f[0] = 0.25
    f[1::2] = -1.0 / (np.pi * nvec) ** 2
    H = 2.0 * np.fft.rfft(f)           # ramp filter in Fourier domain
    h = np.fft.irfft(H, n=size)        # circular impulse response
    # y = irfft(rfft(pad(x)) * H)[:n_det]  ==  circulant(h)[:n_det, :n_det] @ x
    idx = (np.arange(n_det)[:, None] - np.arange(n_det)[None, :]) % size
    return h[idx].astype(np.float32)


def _backprojection_coords(theta_deg: np.ndarray, grid_size: int, n_det: int) -> np.ndarray:
    """Per-angle detector sampling coords (align_corners=True), shape (A, G*G)."""
    u = np.linspace(-1.0, 1.0, grid_size, dtype=np.float64)
    yg, xg = np.meshgrid(u, u, indexing="ij")      # yg[i,j]=u[i], xg[i,j]=u[j]
    rad = theta_deg.astype(np.float64) * np.pi / 180.0
    T = (xg[None, :, :] * np.cos(rad)[:, None, None]
         - yg[None, :, :] * np.sin(rad)[:, None, None])          # (A, G, G)
    iy = (T + 1.0) / 2.0 * (n_det - 1)                            # grid_sample, align_corners=True
    return iy.reshape(len(theta_deg), grid_size * grid_size).astype(np.float32)


def _pick_t_a(n_angles: int, n_det: int) -> int:
    """Angles per grid step: T_A*N multiple of 128 (lane-aligned K block) and
    T_A legal as a sublane block dim (multiple of 8) -- smallest such divisor."""
    cands = [d for d in range(1, n_angles + 1)
             if n_angles % d == 0
             and (d * n_det) % 128 == 0
             and (d % 8 == 0 or d == n_angles)]
    if not cands:
        return n_angles          # full-dim block is always legal
    return cands[0]


# --------------------------------------------------------------------------- Pallas kernels
def _filter_kernel(sino_ref, fmt_ref, out_ref):
    # (TILE_R, N) @ (N, N) -> (TILE_R, N): ramp-filter all rows of this block.
    out_ref[...] = jnp.dot(sino_ref[...], fmt_ref[...],
                           preferred_element_type=jnp.float32)


def _backproject_kernel(sf_ref, iy_ref, out_ref, *, n_det, t_a, n_ab, scale):
    a = pl.program_id(1)                      # angle-block axis (innermost, "arbitrary")

    @pl.when(a == 0)
    def _():
        out_ref[...] = jnp.zeros_like(out_ref)

    tile_gg = iy_ref.shape[1]
    iy = iy_ref[...]                                                   # (T_A, TILE_GG) f32

    # Bilinear ("hat") weights with zeros padding outside [0, N-1]:
    #   w[t, n, g] = max(0, 1 - |n - iy[t, g]|)
    n_pos = lax.broadcasted_iota(jnp.int32, (t_a, n_det, tile_gg), 1).astype(jnp.float32)
    w = jnp.maximum(0.0, 1.0 - jnp.abs(n_pos - iy[:, None, :]))        # (T_A, N, TILE_GG)
    w = w.reshape(t_a * n_det, tile_gg)                                # (K, TILE_GG)

    # Backproject this angle block: (BC, K) @ (K, TILE_GG), bf16 operands, f32 acc.
    sf = sf_ref[...]                                                   # (BC, K) f32
    out_ref[...] += jnp.dot(sf.astype(jnp.bfloat16), w.astype(jnp.bfloat16),
                            preferred_element_type=jnp.float32)

    @pl.when(a == n_ab - 1)
    def _():
        out_ref[...] = out_ref[...] * scale


# --------------------------------------------------------------------------- wrapper
def iradon(x: jax.Array, theta_deg: jax.Array) -> jax.Array:
    """x: sinogram [B, C, N, A] (float32). Returns reconstruction [B, C, in_size, in_size]."""
    B, C, N, A = x.shape
    n_theta = int(theta_deg.shape[0])
    assert A == n_theta, "angle axis of the sinogram must equal len(theta)"

    sqrt2 = float(np.sqrt(np.float32(2.0)))
    in_size = int(np.floor(N / sqrt2))                 # in_size inferred (circle=False)
    grid_size = int(np.ceil(sqrt2 * in_size))
    assert grid_size == N, "IRadon parallel path requires ceil(sqrt2*in_size) == it_size"

    BC = B * C
    GG = grid_size * grid_size

    # ---------------- Stage 1: ramp-filter all angles with one lane-dense matmul
    fmat_t = jnp.asarray(_ramp_filter_matrix(N).T)                     # (N, N), RHS of row matmul
    sino_rows = jnp.transpose(x, (0, 1, 3, 2)).reshape(BC * A, N)      # rows ordered (b, c, a)
    R = BC * A
    tile_r = _round_up(R, 8) if R <= 1024 else 512
    r_pad = _round_up(R, tile_r)
    if r_pad != R:
        sino_rows = jnp.pad(sino_rows, ((0, r_pad - R), (0, 0)))

    sf_rows = pl.pallas_call(
        _filter_kernel,
        out_shape=jax.ShapeDtypeStruct((r_pad, N), jnp.float32),
        grid_spec=pltpu.PrefetchScalarGridSpec(
            num_scalar_prefetch=0,
            grid=(r_pad // tile_r,),
            in_specs=[pl.BlockSpec((tile_r, N), lambda r: (r, 0)),
                      pl.BlockSpec((N, N), lambda r: (0, 0))],
            out_specs=pl.BlockSpec((tile_r, N), lambda r: (r, 0)),
        ),
        compiler_params=pltpu.CompilerParams(dimension_semantics=("parallel",)),
    )(sino_rows, fmat_t)
    sf = sf_rows[:R].reshape(BC, A * N)                 # (BC, A*N): contiguous (a, n) on lanes

    # ---------------- Stage 2: backprojection, image dim on lanes
    t_a = _pick_t_a(A, N)                               # angles per step; K block = t_a*N
    n_ab = A // t_a
    tile_gg = 512 if GG >= 2048 else 128
    # Bound the in-kernel (K x TILE_GG) f32 weight tile (VMEM headroom for v7x's 64 MiB).
    while tile_gg > 128 and t_a * N * tile_gg * 4 > (8 << 20):
        tile_gg //= 2
    gg_pad = _round_up(GG, tile_gg)

    iy_np = _backprojection_coords(np.asarray(theta_deg), grid_size, N)   # (A, GG)
    if gg_pad != GG:
        # padded image positions sample far outside the detector -> hat weight 0
        iy_np = np.concatenate(
            [iy_np, np.full((A, gg_pad - GG), -2.0, dtype=np.float32)], axis=1)
    iy = jnp.asarray(iy_np)                                               # (A, GG_pad)

    kernel = functools.partial(_backproject_kernel, n_det=N, t_a=t_a, n_ab=n_ab,
                               scale=float(np.pi / (2.0 * n_theta)))
    out = pl.pallas_call(
        kernel,
        out_shape=jax.ShapeDtypeStruct((BC, gg_pad), jnp.float32),
        grid_spec=pltpu.PrefetchScalarGridSpec(
            num_scalar_prefetch=0,
            grid=(gg_pad // tile_gg, n_ab),                # (image tiles, angle blocks)
            in_specs=[
                pl.BlockSpec((BC, t_a * N), lambda i, a: (0, a)),   # filtered sinogram K block
                pl.BlockSpec((t_a, tile_gg), lambda i, a: (a, i)),  # sampling coords, lane-dense
            ],
            out_specs=pl.BlockSpec((BC, tile_gg), lambda i, a: (0, i)),  # resident accumulator
        ),
        compiler_params=pltpu.CompilerParams(
            dimension_semantics=("parallel", "arbitrary"),
            vmem_limit_bytes=48 * 1024 * 1024),
    )(sf, iy)

    reco = out[:, :GG].reshape(B, C, grid_size, grid_size)

    # circle=False crop (negative F.pad): keep a centered (in_size, in_size) window.
    W = in_size
    pad = grid_size - W
    pad_before = (W + pad) // 2 - W // 2
    return reco[:, :, pad_before:pad_before + W, pad_before:pad_before + W]


# --------------------------------------------------------------------------- pure-JAX reference
def iradon_reference(x, theta_deg):
    B, C, N, A = x.shape
    fmat = jnp.asarray(_ramp_filter_matrix(N))
    xf = jnp.einsum("mk,bcka->bcma", fmat, x)
    iy = jnp.asarray(_backprojection_coords(np.asarray(theta_deg), N, N)).reshape(A, N, N)
    iy0 = jnp.floor(iy)
    frac = iy - iy0
    iy0i = iy0.astype(jnp.int32)
    nvals = jnp.arange(N)
    w = (jnp.where(nvals[None, None, None, :] == iy0i[..., None], 1.0 - frac[..., None], 0.0)
         + jnp.where(nvals[None, None, None, :] == iy0i[..., None] + 1, frac[..., None], 0.0))
    reco = jnp.einsum("aijn,bcna->bcij", w, xf) * (np.pi / (2.0 * A))
    in_size = int(np.floor(N / np.sqrt(np.float32(2.0))))
    pad = N - in_size
    pad_before = (in_size + pad) // 2 - in_size // 2
    return reco[:, :, pad_before:pad_before + in_size, pad_before:pad_before + in_size]


if __name__ == "__main__":
    key = jax.random.PRNGKey(0)
    B, C, N, A = 2, 4, 16, 16                         # sinogram: [B, C, detector, angles]
    x = jax.random.normal(key, (B, C, N, A), dtype=jnp.float32)
    theta = jnp.arange(A, dtype=jnp.float32) * (180.0 / A)   # A angles in [0, 180)

    out = jax.block_until_ready(iradon(x, theta))
    ref = iradon_reference(x, theta)

    assert out.shape == (B, C, 11, 11), out.shape
    err = float(jnp.max(jnp.abs(out - ref)))
    assert jnp.allclose(out, ref, atol=5e-2, rtol=5e-2), err
    print("KERNEL_OK")
</pallas_src>

<mosaic_0001>
module attributes {stable_mosaic.version = 11 : i64} {
  func.func @_filter_kernel(%arg0: i32, %arg1: memref<128x16xf32, #tpu.memory_space<vmem>>, %arg2: memref<16x16xf32, #tpu.memory_space<vmem>>, %arg3: memref<128x16xf32, #tpu.memory_space<vmem>>) attributes {dimension_semantics = [#tpu.dimension_semantics<parallel>], iteration_bounds = array<i64: 1>, scalar_prefetch = 0 : i64, scratch_operands = 0 : i64, tpu.core_type = #tpu.core_type<tc>, window_params = [{transform_indices = @transform_0, window_bounds = array<i64: 128, 16>}, {pipeline_mode = #tpu.pipeline_mode<synchronous>, transform_indices = @transform_1, window_bounds = array<i64: 16, 16>}, {transform_indices = @transform_2, window_bounds = array<i64: 128, 16>}]} {
    %c0 = arith.constant 0 : index
    %c0_0 = arith.constant 0 : index
    %0 = vector.load %arg1[%c0, %c0_0] : memref<128x16xf32, #tpu.memory_space<vmem>>, vector<128x16xf32>
    %c0_1 = arith.constant 0 : index
    %c0_2 = arith.constant 0 : index
    %1 = vector.load %arg2[%c0_1, %c0_2] : memref<16x16xf32, #tpu.memory_space<vmem>>, vector<16x16xf32>
    %cst = arith.constant dense<0.000000e+00> : vector<128x16xf32>
    %2 = tpu.matmul %0, %1, %cst {dimension_numbers = #tpu.dot_dimension_numbers<[1], [0], [0], [1], [0, 0, 1, 1], [], []>} : vector<128x16xf32>, vector<16x16xf32>, vector<128x16xf32> -> vector<128x16xf32>
    %c0_3 = arith.constant 0 : index
    %c0_4 = arith.constant 0 : index
    %3 = vector.load %arg3[%c0_3, %c0_4] : memref<128x16xf32, #tpu.memory_space<vmem>>, vector<128x16xf32>
    tpu.vector_store %arg3[%c0_3, %c0_4], %2 {strides = array<i32>} : memref<128x16xf32, #tpu.memory_space<vmem>>, vector<128x16xf32>,
    return
  }
  func.func @transform_0(%arg0: i32) -> (i32, i32) {
    %c0_i32 = arith.constant 0 : i32
    %c0_i32_0 = arith.constant 0 : i32
    return %arg0, %c0_i32 : i32, i32
  }
  func.func @transform_1(%arg0: i32) -> (i32, i32) {
    %c0_i32 = arith.constant 0 : i32
    %c0_i32_0 = arith.constant 0 : i32
    %c0_i32_1 = arith.constant 0 : i32
    return %c0_i32, %c0_i32_0 : i32, i32
  }
  func.func @transform_2(%arg0: i32) -> (i32, i32) {
    %c0_i32 = arith.constant 0 : i32
    %c0_i32_0 = arith.constant 0 : i32
    return %arg0, %c0_i32 : i32, i32
  }
}

</mosaic_0001>

<llo_original>
// kernel: tpu_custom_call.1
$region0: #{tpu_custom_call.1}
  #allocation0 [shape = 'u32[]', space=smem, size = 0x4, offset = 0x4, fixed_abs, tag = 'smem constant byte address 0x4 - core index']
  #allocation1 [shape = 'u32[144,128]{1,0:T(1,128)}', space=vmem, size = 0x12000, scoped, tag = 'internal scratch']
  %s0 = inlined_call_operand.vmem [shape: f32[128,16], index: 0, kind: input, shape index: {}]
  %s1 = inlined_call_operand.vmem [shape: f32[16,16], index: 1, kind: input, shape index: {}]
  %s2 = inlined_call_operand.vmem [shape: f32[128,16], index: 2, kind: output, shape index: {}]
  %s3 = sld [smem:[#allocation0]]
  $region18: #{tpu_custom_call.1} parent=0
    _
  %s5 = ssub.s32 1, %s3
  %s6 = scalar_select 0, %s5, %s3
  // Predicated region
  $region2: #{tpu_custom_call.1} parent=0 // pred_check
    _
  $region3: #{tpu_custom_call.1} parent=0 // pred_check_branch
    %8 = sbr.rel (0) target = $region5
  $region4: #{tpu_custom_call.1} parent=0 // pred_region
    _
  $region5: #{tpu_custom_call.1} parent=0 // pred_fallthru
    _
  // Predicated region
  $region6: #{tpu_custom_call.1} parent=0 // pred_check
    _
  $region7: #{tpu_custom_call.1} parent=0 // pred_check_branch
    %10 = sbr.rel (0) target = $region9
  $region8: #{tpu_custom_call.1} parent=0 // pred_region
    _
  $region9: #{tpu_custom_call.1} parent=0 // pred_fallthru
    _
  %v11 = vld [vmem:[%s0] sm:$0xff]
  %v12 = vld [vmem:[%s0 + $0x8] sm:$0xff]
  %v13 = vld [vmem:[%s0 + $0x10] sm:$0xff]
  %v14 = vld [vmem:[%s0 + $0x18] sm:$0xff]
  %v15 = vld [vmem:[%s0 + $0x20] sm:$0xff]
  %v16 = vld [vmem:[%s0 + $0x28] sm:$0xff]
  %v17 = vld [vmem:[%s0 + $0x30] sm:$0xff]
  %v18 = vld [vmem:[%s0 + $0x38] sm:$0xff]
  %v19 = vld [vmem:[%s0 + $0x40] sm:$0xff]
  %v20 = vld [vmem:[%s0 + $0x48] sm:$0xff]
  %v21 = vld [vmem:[%s0 + $0x50] sm:$0xff]
  %v22 = vld [vmem:[%s0 + $0x58] sm:$0xff]
  %v23 = vld [vmem:[%s0 + $0x60] sm:$0xff]
  %v24 = vld [vmem:[%s0 + $0x68] sm:$0xff]
  %v25 = vld [vmem:[%s0 + $0x70] sm:$0xff]
  %v26 = vld [vmem:[%s0 + $0x78] sm:$0xff]
  %v27 = vld [vmem:[%s1] sm:$0xff]
  %v28 = vld [vmem:[%s1 + $0x8] sm:$0xff]
  %vm29 = vcmask 130048
  %v31 = vsel %vm29, %v11, 0
  %v34 = vsel %vm29, %v12, 0
  %v37 = vsel %vm29, %v13, 0
  %v40 = vsel %vm29, %v14, 0
  %v43 = vsel %vm29, %v15, 0
  %v46 = vsel %vm29, %v16, 0
  %v49 = vsel %vm29, %v17, 0
  %v52 = vsel %vm29, %v18, 0
  %v55 = vsel %vm29, %v19, 0
  %v58 = vsel %vm29, %v20, 0
  %v61 = vsel %vm29, %v21, 0
  %v64 = vsel %vm29, %v22, 0
  %v67 = vsel %vm29, %v23, 0
  %v70 = vsel %vm29, %v24, 0
  %v73 = vsel %vm29, %v25, 0
  %v76 = vsel %vm29, %v26, 0
  %78 = vmatprep.subr.mxu0 0.0
  %79 = vmatpush1.msra.mxu0 0.0
  %80 = vmatprep.subr.mxu0 0.0
  %81 = vmatpush1.msra.mxu0 0.0
  %82 = vmatprep.subr.mxu0 0.0
  %83 = vmatpush1.msra.mxu0 0.0
  %84 = vmatprep.subr.mxu0 0.0
  %85 = vmatpush1.msra.mxu0 0.0
  %86 = vmatprep.subr.mxu0 0.0
  %87 = vmatpush1.msra.mxu0 0.0
  %88 = vmatprep.subr.mxu0 0.0
  %89 = vmatpush1.msra.mxu0 0.0
  %90 = vmatprep.subr.mxu0 0.0
  %91 = vmatpush1.msra.mxu0 0.0
  %92 = vmatprep.subr.mxu0 0.0
  %93 = vmatpush1.msra.mxu0 0.0
  %94 = vmatprep.subr.mxu0 0.0
  %95 = vmatpush1.msra.mxu0 0.0
  %96 = vmatprep.subr.mxu0 0.0
  %97 = vmatpush1.msra.mxu0 0.0
  %98 = vmatprep.subr.mxu0 0.0
  %99 = vmatpush1.msra.mxu0 0.0
  %100 = vmatprep.subr.mxu0 0.0
  %101 = vmatpush1.msra.mxu0 0.0
  %102 = vmatprep.subr.mxu0 0.0
  %103 = vmatpush1.msra.mxu0 0.0
  %104 = vmatprep.subr.mxu0 0.0
  %105 = vmatpush1.msra.mxu0 0.0
  %106 = vmatprep.subr.mxu0 0.0
  %107 = vmatpush1.msra.mxu0 %v28
  %108 = vmatprep.subr.mxu0 0.0
  %109 = vmatpush1.msra.mxu0 %v27
  %110 = vmatprep.subr.mxu0 0.0
  %111 = vmatpush2.msra.mxu0 0.0
  %112 = vmatprep.subr.mxu0 0.0
  %113 = vmatpush2.msra.mxu0 0.0
  %114 = vmatprep.subr.mxu0 0.0
  %115 = vmatpush2.msra.mxu0 0.0
  %116 = vmatprep.subr.mxu0 0.0
  %117 = vmatpush2.msra.mxu0 0.0
  %118 = vmatprep.subr.mxu0 0.0
  %119 = vmatpush2.msra.mxu0 0.0
  %120 = vmatprep.subr.mxu0 0.0
  %121 = vmatpush2.msra.mxu0 0.0
  %122 = vmatprep.subr.mxu0 0.0
  %123 = vmatpush2.msra.mxu0 0.0
  %124 = vmatprep.subr.mxu0 0.0
  %125 = vmatpush2.msra.mxu0 0.0
  %126 = vmatprep.subr.mxu0 0.0
  %127 = vmatpush2.msra.mxu0 0.0
  %128 = vmatprep.subr.mxu0 0.0
  %129 = vmatpush2.msra.mxu0 0.0
  %130 = vmatprep.subr.mxu0 0.0
  %131 = vmatpush2.msra.mxu0 0.0
  %132 = vmatprep.subr.mxu0 0.0
  %133 = vmatpush2.msra.mxu0 0.0
  %134 = vmatprep.subr.mxu0 0.0
  %135 = vmatpush2.msra.mxu0 0.0
  %136 = vmatprep.subr.mxu0 0.0
  %137 = vmatpush2.msra.mxu0 0.0
  %138 = vmatprep.subr.mxu0 0.0
  %139 = vmatpush2.msra.mxu0 0.0
  %140 = vmatprep.subr.mxu0 0.0
  %141 = vmatpush2.msra.mxu0 0.0
  %142 = vmatprep.mubr.f32.mxu0 0.0
  %143 = vmatmul.mubr.f32.gmra.mxu0 %v31
  %v144 = vpop.f32.mrf.mxu0
  %v145 = vadd.f32 0.0, %v144
  %v146 = vpop.f32.mrf.mxu0
  %147 = vmatprep.mubr.f32.mxu0 0.0
  %148 = vmatmul.mubr.f32.gmra.mxu0 %v34
  %v149 = vpop.f32.mrf.mxu0
  %v150 = vadd.f32 0.0, %v149
  %v151 = vpop.f32.mrf.mxu0
  %152 = vmatprep.mubr.f32.mxu0 0.0
  %153 = vmatmul.mubr.f32.gmra.mxu0 %v37
  %v154 = vpop.f32.mrf.mxu0
  %v155 = vadd.f32 0.0, %v154
  %v156 = vpop.f32.mrf.mxu0
  %157 = vmatprep.mubr.f32.mxu0 0.0
  %158 = vmatmul.mubr.f32.gmra.mxu0 %v40
  %v159 = vpop.f32.mrf.mxu0
  %v160 = vadd.f32 0.0, %v159
  %v161 = vpop.f32.mrf.mxu0
  %162 = vmatprep.mubr.f32.mxu0 0.0
  %163 = vmatmul.mubr.f32.gmra.mxu0 %v43
  %v164 = vpop.f32.mrf.mxu0
  %v165 = vadd.f32 0.0, %v164
  %v166 = vpop.f32.mrf.mxu0
  %167 = vmatprep.mubr.f32.mxu0 0.0
  %168 = vmatmul.mubr.f32.gmra.mxu0 %v46
  %v169 = vpop.f32.mrf.mxu0
  %v170 = vadd.f32 0.0, %v169
  %v171 = vpop.f32.mrf.mxu0
  %172 = vmatprep.mubr.f32.mxu0 0.0
  %173 = vmatmul.mubr.f32.gmra.mxu0 %v49
  %v174 = vpop.f32.mrf.mxu0
  %v175 = vadd.f32 0.0, %v174
  %v176 = vpop.f32.mrf.mxu0
  %177 = vmatprep.mubr.f32.mxu0 0.0
  %178 = vmatmul.mubr.f32.gmra.mxu0 %v52
  %v179 = vpop.f32.mrf.mxu0
  %v180 = vadd.f32 0.0, %v179
  %v181 = vpop.f32.mrf.mxu0
  %182 = vmatprep.mubr.f32.mxu0 0.0
  %183 = vmatmul.mubr.f32.gmra.mxu0 %v55
  %v184 = vpop.f32.mrf.mxu0
  %v185 = vadd.f32 0.0, %v184
  %v186 = vpop.f32.mrf.mxu0
  %187 = vmatprep.mubr.f32.mxu0 0.0
  %188 = vmatmul.mubr.f32.gmra.mxu0 %v58
  %v189 = vpop.f32.mrf.mxu0
  %v190 = vadd.f32 0.0, %v189
  %v191 = vpop.f32.mrf.mxu0
  %192 = vmatprep.mubr.f32.mxu0 0.0
  %193 = vmatmul.mubr.f32.gmra.mxu0 %v61
  %v194 = vpop.f32.mrf.mxu0
  %v195 = vadd.f32 0.0, %v194
  %v196 = vpop.f32.mrf.mxu0
  %197 = vmatprep.mubr.f32.mxu0 0.0
  %198 = vmatmul.mubr.f32.gmra.mxu0 %v64
  %v199 = vpop.f32.mrf.mxu0
  %v200 = vadd.f32 0.0, %v199
  %v201 = vpop.f32.mrf.mxu0
  %202 = vmatprep.mubr.f32.mxu0 0.0
  %203 = vmatmul.mubr.f32.gmra.mxu0 %v67
  %v204 = vpop.f32.mrf.mxu0
  %v205 = vadd.f32 0.0, %v204
  %v206 = vpop.f32.mrf.mxu0
  %207 = vmatprep.mubr.f32.mxu0 0.0
  %208 = vmatmul.mubr.f32.gmra.mxu0 %v70
  %v209 = vpop.f32.mrf.mxu0
  %v210 = vadd.f32 0.0, %v209
  %v211 = vpop.f32.mrf.mxu0
  %212 = vmatprep.mubr.f32.mxu0 0.0
  %213 = vmatmul.mubr.f32.gmra.mxu0 %v73
  %v214 = vpop.f32.mrf.mxu0
  %v215 = vadd.f32 0.0, %v214
  %v216 = vpop.f32.mrf.mxu0
  %217 = vmatprep.mubr.f32.mxu0 0.0
  %218 = vmatmul.mubr.f32.gmra.mxu0 %v76
  %v219 = vpop.f32.mrf.mxu0
  %v220 = vadd.f32 0.0, %v219
  %v221 = vpop.f32.mrf.mxu0
  %222 = vdwg.mxu0
  %223 = vst.msk [vmem:[%s2] sm:$0xff] %vm29, %v145
  %224 = vst.msk [vmem:[%s2 + $0x8] sm:$0xff] %vm29, %v150
  %225 = vst.msk [vmem:[%s2 + $0x10] sm:$0xff] %vm29, %v155
  %226 = vst.msk [vmem:[%s2 + $0x18] sm:$0xff] %vm29, %v160
  %227 = vst.msk [vmem:[%s2 + $0x20] sm:$0xff] %vm29, %v165
  %228 = vst.msk [vmem:[%s2 + $0x28] sm:$0xff] %vm29, %v170
  %229 = vst.msk [vmem:[%s2 + $0x30] sm:$0xff] %vm29, %v175
  %230 = vst.msk [vmem:[%s2 + $0x38] sm:$0xff] %vm29, %v180
  %231 = vst.msk [vmem:[%s2 + $0x40] sm:$0xff] %vm29, %v185
  %232 = vst.msk [vmem:[%s2 + $0x48] sm:$0xff] %vm29, %v190
  %233 = vst.msk [vmem:[%s2 + $0x50] sm:$0xff] %vm29, %v195
  %234 = vst.msk [vmem:[%s2 + $0x58] sm:$0xff] %vm29, %v200
  %235 = vst.msk [vmem:[%s2 + $0x60] sm:$0xff] %vm29, %v205
  %236 = vst.msk [vmem:[%s2 + $0x68] sm:$0xff] %vm29, %v210
  %237 = vst.msk [vmem:[%s2 + $0x70] sm:$0xff] %vm29, %v215
  %238 = vst.msk [vmem:[%s2 + $0x78] sm:$0xff] %vm29, %v220
  // Predicated region
  $region10: #{tpu_custom_call.1} parent=0 // pred_check
    _
  $region11: #{tpu_custom_call.1} parent=0 // pred_check_branch
    %240 = sbr.rel (0) target = $region13
  $region12: #{tpu_custom_call.1} parent=0 // pred_region
    _
  $region13: #{tpu_custom_call.1} parent=0 // pred_fallthru
    _
  // Predicated region
  $region14: #{tpu_custom_call.1} parent=0 // pred_check
    _
  $region15: #{tpu_custom_call.1} parent=0 // pred_check_branch
    %242 = sbr.rel (0) target = $region17
  $region16: #{tpu_custom_call.1} parent=0 // pred_region
    _
  $region17: #{tpu_custom_call.1} parent=0 // pred_fallthru
    _

</llo_original>
